<compile_context>
chip_gen: v7x
topology: tpu7x:2x2x1
jax: 0.10.0
libtpu: 0.0.40
codegen_flags: <defaults>
</compile_context>

<pallas_src>
import jax
import jax.numpy as jnp
from jax.experimental import pallas as pl
from jax.experimental.pallas import tpu as pltpu


def policy_net_kernel(x_ref, w_ref, b_ref, out_ref):
    # x_ref:  (TB, state_dim)          current batch tile
    # w_ref:  (action_dim, state_dim)  torch nn.Linear weight layout (resident)
    # b_ref:  (1, action_dim)          bias, 2D for lane layout (resident)
    # out_ref:(TB, action_dim)
    x = x_ref[...].astype(jnp.float32)
    w = w_ref[...].astype(jnp.float32)
    b = b_ref[...].astype(jnp.float32)

    # logits = x @ W^T + b, with the transpose folded into dimension_numbers
    # so no materialized transpose is emitted before the MXU.
    logits = jax.lax.dot_general(
        x, w,
        dimension_numbers=(((1,), (1,)), ((), ())),
        preferred_element_type=jnp.float32,
    ) + b

    # Numerically stable softmax over the last axis.
    m = jnp.max(logits, axis=-1, keepdims=True)
    e = jnp.exp(logits - m)
    denom = jnp.sum(e, axis=-1, keepdims=True)

    # EUP approximate reciprocal (own VLIW slot) + one Newton-Raphson step
    # to bring the result back to ~f32 accuracy: r <- r * (2 - denom * r).
    r = pl.reciprocal(denom, approx=True)
    r = r * (2.0 - denom * r)

    out_ref[...] = (e * r).astype(out_ref.dtype)


def policy_net_forward(state, weight, bias, *, block_b=512):
    """state: (B, state_dim) f32; weight: (action_dim, state_dim); bias: (action_dim,).

    Returns softmax(state @ weight.T + bias) with shape (B, action_dim).
    """
    B, state_dim = state.shape
    action_dim = weight.shape[0]
    bias2d = bias.reshape(1, action_dim)

    # Batch tile: as large as reasonable (>=512 rows reaches ~85% of HBM
    # roofline in the measured sweep), clipped to B, and a multiple of 8
    # (sublane) whenever it does not cover the whole batch. block_b=512 keeps
    # the double-buffered x/out tiles far under v7x's 64 MiB VMEM.
    tb = min(block_b, B)
    if tb < B:
        tb = max(8, (tb // 8) * 8)
    grid = (pl.cdiv(B, tb),)

    return pl.pallas_call(
        policy_net_kernel,
        out_shape=jax.ShapeDtypeStruct((B, action_dim), jnp.float32),
        grid_spec=pltpu.PrefetchScalarGridSpec(
            num_scalar_prefetch=0,
            grid=grid,
            in_specs=[
                # Activation: tiled over batch -> double-buffered DMA.
                pl.BlockSpec((tb, state_dim), lambda i: (i, 0)),
                # Weight / bias: constant index_map -> resident across tiles.
                pl.BlockSpec((action_dim, state_dim), lambda i: (0, 0)),
                pl.BlockSpec((1, action_dim), lambda i: (0, 0)),
            ],
            out_specs=pl.BlockSpec((tb, action_dim), lambda i: (i, 0)),
        ),
        compiler_params=pltpu.CompilerParams(
            # Independent batch tiles: shard across TensorCores on v7x.
            dimension_semantics=("parallel",),
        ),
    )(state, weight, bias2d)


if __name__ == "__main__":
    # Small shapes consistent with the module; batch chosen so the kernel
    # actually exercises multiple tiles (grid=(2,) with tb=128).
    B, state_dim, action_dim = 256, 32, 16

    key = jax.random.PRNGKey(0)
    k_state, k_w, k_b = jax.random.split(key, 3)

    # Deterministic param init mimicking torch nn.Linear default
    # (uniform(-1/sqrt(fan_in), 1/sqrt(fan_in))).
    bound = 1.0 / jnp.sqrt(jnp.float32(state_dim))
    weight = jax.random.uniform(k_w, (action_dim, state_dim), jnp.float32, -bound, bound)
    bias = jax.random.uniform(k_b, (action_dim,), jnp.float32, -bound, bound)

    state = jax.random.normal(k_state, (B, state_dim), jnp.float32)

    probs = policy_net_forward(state, weight, bias, block_b=128)
    probs = jax.block_until_ready(probs)

    # Reference check in plain JAX.
    ref = jax.nn.softmax(state @ weight.T + bias, axis=-1)
    assert probs.shape == (B, action_dim)
    assert jnp.allclose(jnp.sum(probs, axis=-1), 1.0, atol=1e-5)
    assert jnp.allclose(probs, ref, atol=1e-5)

    print("KERNEL_OK")
</pallas_src>

<mosaic_0001>
module attributes {stable_mosaic.version = 11 : i64} {
  func.func @policy_net_kernel(%arg0: i32, %arg1: memref<128x32xf32, #tpu.memory_space<vmem>>, %arg2: memref<16x32xf32, #tpu.memory_space<vmem>>, %arg3: memref<1x16xf32, #tpu.memory_space<vmem>>, %arg4: memref<128x16xf32, #tpu.memory_space<vmem>>) attributes {dimension_semantics = [#tpu.dimension_semantics<parallel>], iteration_bounds = array<i64: 2>, scalar_prefetch = 0 : i64, scratch_operands = 0 : i64, tpu.core_type = #tpu.core_type<tc>, window_params = [{transform_indices = @transform_0, window_bounds = array<i64: 128, 32>}, {pipeline_mode = #tpu.pipeline_mode<synchronous>, transform_indices = @transform_1, window_bounds = array<i64: 16, 32>}, {pipeline_mode = #tpu.pipeline_mode<synchronous>, transform_indices = @transform_2, window_bounds = array<i64: 1, 16>}, {transform_indices = @transform_3, window_bounds = array<i64: 128, 16>}]} {
    %c0 = arith.constant 0 : index
    %c0_0 = arith.constant 0 : index
    %0 = vector.load %arg1[%c0, %c0_0] : memref<128x32xf32, #tpu.memory_space<vmem>>, vector<128x32xf32>
    %c0_1 = arith.constant 0 : index
    %c0_2 = arith.constant 0 : index
    %1 = vector.load %arg2[%c0_1, %c0_2] : memref<16x32xf32, #tpu.memory_space<vmem>>, vector<16x32xf32>
    %c0_3 = arith.constant 0 : index
    %c0_4 = arith.constant 0 : index
    %2 = vector.load %arg3[%c0_3, %c0_4] : memref<1x16xf32, #tpu.memory_space<vmem>>, vector<1x16xf32>
    %cst = arith.constant dense<0.000000e+00> : vector<128x16xf32>
    %3 = tpu.matmul %0, %1, %cst {dimension_numbers = #tpu.dot_dimension_numbers<[1], [1], [0], [0], [0, 0, 1, 0], [], []>} : vector<128x32xf32>, vector<16x32xf32>, vector<128x16xf32> -> vector<128x16xf32>
    %4 = vector.broadcast %2 : vector<1x16xf32> to vector<128x16xf32>
    %5 = arith.addf %3, %4 : vector<128x16xf32>
    %cst_5 = arith.constant dense<0xFF800000> : vector<128xf32>
    %6 = vector.multi_reduction <maximumf>, %5, %cst_5 [1] : vector<128x16xf32> to vector<128xf32>
    %7 = vector.shape_cast %6 : vector<128xf32> to vector<128x1xf32>
    %8 = vector.broadcast %7 : vector<128x1xf32> to vector<128x16xf32>
    %9 = arith.subf %5, %8 : vector<128x16xf32>
    %10 = math.exp %9 : vector<128x16xf32>
    %cst_6 = arith.constant dense<0.000000e+00> : vector<128xf32>
    %11 = vector.multi_reduction <add>, %10, %cst_6 [1] : vector<128x16xf32> to vector<128xf32>
    %12 = vector.shape_cast %11 : vector<128xf32> to vector<128x1xf32>
    %13 = tpu.reciprocal %12 {approx = true} : vector<128x1xf32> -> vector<128x1xf32>
    %14 = arith.mulf %12, %13 : vector<128x1xf32>
    %cst_7 = arith.constant 2.000000e+00 : f32
    %15 = vector.broadcast %cst_7 : f32 to vector<128x1xf32>
    %16 = arith.subf %15, %14 : vector<128x1xf32>
    %17 = arith.mulf %13, %16 : vector<128x1xf32>
    %18 = vector.broadcast %17 : vector<128x1xf32> to vector<128x16xf32>
    %19 = arith.mulf %10, %18 : vector<128x16xf32>
    %c0_8 = arith.constant 0 : index
    %c0_9 = arith.constant 0 : index
    %20 = vector.load %arg4[%c0_8, %c0_9] : memref<128x16xf32, #tpu.memory_space<vmem>>, vector<128x16xf32>
    tpu.vector_store %arg4[%c0_8, %c0_9], %19 {strides = array<i32>} : memref<128x16xf32, #tpu.memory_space<vmem>>, vector<128x16xf32>,
    return
  }
  func.func @transform_0(%arg0: i32) -> (i32, i32) {
    %c0_i32 = arith.constant 0 : i32
    %c0_i32_0 = arith.constant 0 : i32
    return %arg0, %c0_i32 : i32, i32
  }
  func.func @transform_1(%arg0: i32) -> (i32, i32) {
    %c0_i32 = arith.constant 0 : i32
    %c0_i32_0 = arith.constant 0 : i32
    %c0_i32_1 = arith.constant 0 : i32
    return %c0_i32, %c0_i32_0 : i32, i32
  }
  func.func @transform_2(%arg0: i32) -> (i32, i32) {
    %c0_i32 = arith.constant 0 : i32
    %c0_i32_0 = arith.constant 0 : i32
    %c0_i32_1 = arith.constant 0 : i32
    return %c0_i32, %c0_i32_0 : i32, i32
  }
  func.func @transform_3(%arg0: i32) -> (i32, i32) {
    %c0_i32 = arith.constant 0 : i32
    %c0_i32_0 = arith.constant 0 : i32
    return %arg0, %c0_i32 : i32, i32
  }
}

</mosaic_0001>

<llo_original>
// kernel: tpu_custom_call.1
$region0: #{tpu_custom_call.1}
  #allocation0 [shape = 'u32[]', space=smem, size = 0x4, offset = 0x4, fixed_abs, tag = 'smem constant byte address 0x4 - core index']
  #allocation1 [shape = 'u32[144,128]{1,0:T(1,128)}', space=vmem, size = 0x12000, scoped, tag = 'internal scratch']
  %s0 = inlined_call_operand.vmem [shape: f32[256,32], index: 0, kind: input, shape index: {}]
  %s1 = inlined_call_operand.vmem [shape: f32[16,32], index: 1, kind: input, shape index: {}]
  %s2 = inlined_call_operand.vmem [shape: f32[1,16], index: 2, kind: input, shape index: {}]
  %s3 = inlined_call_operand.vmem [shape: f32[256,16], index: 3, kind: output, shape index: {}]
  %s4 = sld [smem:[#allocation0]]
  $region45: #{tpu_custom_call.1} parent=0
    _
  %s6 = ssub.s32 1, %s4
  %s7 = scalar_select 0, %s6, %s4
  loop: start=0, step=1, limit=4
  $region2: #{tpu_custom_call.1} parent=0 // loop_pre_header
    _
  $region3: #{tpu_custom_call.1} parent=0 // loop_header
    %s9 = sphi 0, %s13
    %p10 = scmp.ge.s32.totalorder %s9, 4
    %s19 = sphi 0, %s21
    %s22 = sphi 0, %s19
    %s23 = sphi 0, %s22
    %s39 = sphi 0, %s23
    %s43 = sphi 0, %s43
    %s45 = sphi 0, %s43
    %s46 = sphi 0, %s45
    %s60 = sphi 0, %s46
    %s64 = sphi 0, %s64
    %s66 = sphi 0, %s64
    %s67 = sphi 0, %s66
    %s81 = sphi 0, %s67
    %s87 = sphi 0, %s89
    %s90 = sphi 0, %s87
    %s91 = sphi 0, %s90
    %s107 = sphi 0, %s91
  $region4: #{tpu_custom_call.1} parent=0 // loop_header_branch
    %12 = sbr.rel (%p10) target = $region8
  $region5: #{tpu_custom_call.1} parent=0 // loop_body
    %s14 = ssub.s32 %s9, 1
    %s15 = ssub.s32 %s9, 2
    %s16 = sadd.s32 %s9, 1
    %s17 = ssub.s32 %s9, %s16
    %p18 = scmp.eq.s32.totalorder %s17, 0
    %s20 = sadd.s32 %s19, 1
    %s21 = scalar_select %p18, %s19, %s20
    %p24 = pneg %p18
    %p25 = scmp.eq.s32.totalorder %s9, 1
    %p26 = por %p24, %p25
    %p27 = scmp.ne.s32.totalorder %s19, %s22
    %p28 = scmp.eq.s32.totalorder %s9, 0
    %p29 = por %p27, %p28
    %p30 = scmp.ne.s32.totalorder %s19, %s22
    %p31 = scmp.eq.s32.totalorder %s14, 1
    %p32 = por %p30, %p31
    %p33 = scmp.ne.s32.totalorder %s22, %s23
    %p34 = scmp.eq.s32.totalorder %s14, 0
    %p35 = por %p33, %p34
    %p36 = scmp.ne.s32.totalorder %s22, %s23
    %p37 = scmp.eq.s32.totalorder %s15, 1
    %p38 = por %p36, %p37
    %p40 = scmp.ne.s32.totalorder %s23, %s39
    %p41 = scmp.eq.s32.totalorder %s15, 0
    %p42 = por %p40, %p41
    %s44 = sadd.s32 %s43, 1
    %p47 = scmp.eq.s32.totalorder %s9, 1
    %p48 = scmp.ne.s32.totalorder %s43, %s45
    %p49 = scmp.eq.s32.totalorder %s9, 0
    %p50 = por %p48, %p49
    %p51 = scmp.ne.s32.totalorder %s43, %s45
    %p52 = scmp.eq.s32.totalorder %s14, 1
    %p53 = por %p51, %p52
    %p54 = scmp.ne.s32.totalorder %s45, %s46
    %p55 = scmp.eq.s32.totalorder %s14, 0
    %p56 = por %p54, %p55
    %p57 = scmp.ne.s32.totalorder %s45, %s46
    %p58 = scmp.eq.s32.totalorder %s15, 1
    %p59 = por %p57, %p58
    %p61 = scmp.ne.s32.totalorder %s46, %s60
    %p62 = scmp.eq.s32.totalorder %s15, 0
    %p63 = por %p61, %p62
    %s65 = sadd.s32 %s64, 1
    %p68 = scmp.eq.s32.totalorder %s9, 1
    %p69 = scmp.ne.s32.totalorder %s64, %s66
    %p70 = scmp.eq.s32.totalorder %s9, 0
    %p71 = por %p69, %p70
    %p72 = scmp.ne.s32.totalorder %s64, %s66
    %p73 = scmp.eq.s32.totalorder %s14, 1
    %p74 = por %p72, %p73
    %p75 = scmp.ne.s32.totalorder %s66, %s67
    %p76 = scmp.eq.s32.totalorder %s14, 0
    %p77 = por %p75, %p76
    %p78 = scmp.ne.s32.totalorder %s66, %s67
    %p79 = scmp.eq.s32.totalorder %s15, 1
    %p80 = por %p78, %p79
    %p82 = scmp.ne.s32.totalorder %s67, %s81
    %p83 = scmp.eq.s32.totalorder %s15, 0
    %p84 = por %p82, %p83
    %s85 = ssub.s32 %s9, %s16
    %p86 = scmp.eq.s32.totalorder %s85, 0
    %s88 = sadd.s32 %s87, 1
    %s89 = scalar_select %p86, %s87, %s88
    %p92 = pneg %p86
    %p93 = scmp.eq.s32.totalorder %s9, 1
    %p94 = por %p92, %p93
    %p95 = scmp.ne.s32.totalorder %s87, %s90
    %p96 = scmp.eq.s32.totalorder %s9, 0
    %p97 = por %p95, %p96
    %p98 = scmp.ne.s32.totalorder %s87, %s90
    %p99 = scmp.eq.s32.totalorder %s14, 1
    %p100 = por %p98, %p99
    %p101 = scmp.ne.s32.totalorder %s90, %s91
    %p102 = scmp.eq.s32.totalorder %s14, 0
    %p103 = por %p101, %p102
    %p104 = scmp.ne.s32.totalorder %s90, %s91
    %p105 = scmp.eq.s32.totalorder %s15, 1
    %p106 = por %p104, %p105
    %p108 = scmp.ne.s32.totalorder %s91, %s107
    %p109 = scmp.eq.s32.totalorder %s15, 0
    %p110 = por %p108, %p109
    %p111 = scmp.le.s32.totalorder 1, %s9
    %p112 = scmp.lt.s32.totalorder %s9, 3
    %p113 = pnand %p111, %p112
    %p114 = pneg %p113
    // Predicated region
    $region9: #{tpu_custom_call.1} parent=5 // pred_check
      _
    $region10: #{tpu_custom_call.1} parent=5 // pred_check_branch
      %116 = sbr.rel (%p113) target = $region12
    $region11: #{tpu_custom_call.1} parent=5 // pred_region
      %s117 = ssub.s32 %s9, 1
      // Predicated region
      $region13: #{tpu_custom_call.1} parent=11 // pred_check
        %p118 = pneg %p56
      $region14: #{tpu_custom_call.1} parent=11 // pred_check_branch
        %120 = sbr.rel (%p118) target = $region16
      $region15: #{tpu_custom_call.1} parent=11 // pred_region
        _
      $region16: #{tpu_custom_call.1} parent=11 // pred_fallthru
        _
      // Predicated region
      $region17: #{tpu_custom_call.1} parent=11 // pred_check
        %p121 = pneg %p77
      $region18: #{tpu_custom_call.1} parent=11 // pred_check_branch
        %123 = sbr.rel (%p121) target = $region20
      $region19: #{tpu_custom_call.1} parent=11 // pred_region
        _
      $region20: #{tpu_custom_call.1} parent=11 // pred_fallthru
        _
    $region12: #{tpu_custom_call.1} parent=5 // pred_fallthru
      _
    %p124 = scmp.lt.s32.totalorder %s9, 2
    // Predicated region
    $region21: #{tpu_custom_call.1} parent=5 // pred_check
      %p125 = pneg %p124
    $region22: #{tpu_custom_call.1} parent=5 // pred_check_branch
      %127 = sbr.rel (%p125) target = $region24
    $region23: #{tpu_custom_call.1} parent=5 // pred_region
      // Predicated region
      $region25: #{tpu_custom_call.1} parent=23 // pred_check
        %p128 = pneg %p29
      $region26: #{tpu_custom_call.1} parent=23 // pred_check_branch
        %130 = sbr.rel (%p128) target = $region28
      $region27: #{tpu_custom_call.1} parent=23 // pred_region
        %s131 = smul.u32 16, %s9
        %p132 = scmp.lt.s32.totalorder %s131, 31
        %s133 = scalar_select %p132, %s131, 31
        %s134 = smul.addr %s133, 8
        %s135 = scalar_lea.vmem %s0, %s134
        %s136 = smul.u32 16, %s9
      $region28: #{tpu_custom_call.1} parent=23 // pred_fallthru
        _
    $region24: #{tpu_custom_call.1} parent=5 // pred_fallthru
      _
    %p137 = scmp.le.s32.totalorder 1, %s9
    %p138 = scmp.lt.s32.totalorder %s9, 3
    %p139 = pnand %p137, %p138
    %p140 = pneg %p139
    // Predicated region
    $region29: #{tpu_custom_call.1} parent=5 // pred_check
      _
    $region30: #{tpu_custom_call.1} parent=5 // pred_check_branch
      %142 = sbr.rel (%p139) target = $region32
    $region31: #{tpu_custom_call.1} parent=5 // pred_region
      %s143 = ssub.s32 %s9, 1
      %s144 = smul.u32 16, %s14
      %p145 = scmp.lt.s32.totalorder %s144, 31
      %s146 = scalar_select %p145, %s144, 31
      %s147 = smul.addr %s146, 8
      %s148 = scalar_lea.vmem %s0, %s147
      %p149 = pneg %p35
      %p150 = pneg %p32
      %p151 = pneg %p56
      %p152 = pneg %p53
      %p153 = pneg %p77
      %p154 = pneg %p74
      %p155 = pneg %p103
      %p156 = pneg %p100
      %s157 = smul.u32 16, %s14
      %p158 = scmp.lt.s32.totalorder %s157, 31
      %s159 = scalar_select %p158, %s157, 31
      %s160 = smul.addr %s159, 8
      %s161 = scalar_lea.vmem %s3, %s160
      %s162 = smul.u32 16, %s14
      %p163 = scmp.lt.s32.totalorder %s162, 31
      %s164 = scalar_select %p163, %s162, 31
      %s165 = smul.addr %s164, 8
      %s166 = scalar_lea.vmem %s0, %s165
      %s167 = smul.u32 16, %s14
      %s168 = smul.u32 16, %s14
      %p169 = scmp.lt.s32.totalorder %s168, 31
      %s170 = scalar_select %p169, %s168, 31
      %s171 = smul.addr %s170, 8
      %s172 = scalar_lea.vmem %s3, %s171
      %s173 = smul.u32 16, %s14
      %v174 = vld [vmem:[%s166] sm:$0xff]
      %v175 = vld [vmem:[%s166 + $0x8] sm:$0xff]
      %v176 = vld [vmem:[%s166 + $0x10] sm:$0xff]
      %v177 = vld [vmem:[%s166 + $0x18] sm:$0xff]
      %v178 = vld [vmem:[%s166 + $0x20] sm:$0xff]
      %v179 = vld [vmem:[%s166 + $0x28] sm:$0xff]
      %v180 = vld [vmem:[%s166 + $0x30] sm:$0xff]
      %v181 = vld [vmem:[%s166 + $0x38] sm:$0xff]
      %v182 = vld [vmem:[%s166 + $0x40] sm:$0xff]
      %v183 = vld [vmem:[%s166 + $0x48] sm:$0xff]
      %v184 = vld [vmem:[%s166 + $0x50] sm:$0xff]
      %v185 = vld [vmem:[%s166 + $0x58] sm:$0xff]
      %v186 = vld [vmem:[%s166 + $0x60] sm:$0xff]
      %v187 = vld [vmem:[%s166 + $0x68] sm:$0xff]
      %v188 = vld [vmem:[%s166 + $0x70] sm:$0xff]
      %v189 = vld [vmem:[%s166 + $0x78] sm:$0xff]
      %v190 = vld [vmem:[%s1] sm:$0xff]
      %v191 = vld [vmem:[%s1 + $0x8] sm:$0xff]
      %v192 = vld [vmem:[%s2] sm:$0x1]
      %v194 = vlaneseq
      %v195 = vshrl.u32 %v194, 7
      %v196 = vsub.s32 0, %v195
      %v197 = vrot.slane %v192, %v196
      %vm199 = vcmask 261120
      %v201 = vsel %vm199, %v174, 0
      %v204 = vsel %vm199, %v175, 0
      %v207 = vsel %vm199, %v176, 0
      %v210 = vsel %vm199, %v177, 0
      %v213 = vsel %vm199, %v178, 0
      %v216 = vsel %vm199, %v179, 0
      %v219 = vsel %vm199, %v180, 0
      %v222 = vsel %vm199, %v181, 0
      %v225 = vsel %vm199, %v182, 0
      %v228 = vsel %vm199, %v183, 0
      %v231 = vsel %vm199, %v184, 0
      %v234 = vsel %vm199, %v185, 0
      %v237 = vsel %vm199, %v186, 0
      %v240 = vsel %vm199, %v187, 0
      %v243 = vsel %vm199, %v188, 0
      %v246 = vsel %vm199, %v189, 0
      %v249 = vsel %vm199, %v190, 0
      %v252 = vsel %vm199, %v191, 0
      %254 = vmatprep.subr.mxu0 0.0
      %255 = vmatpush1.xpose.msra.mxu0 %v249
      %256 = vmatprep.subr.mxu0 0.0
      %257 = vmatpush1.xpose.msra.mxu0 %v252
      %258 = vmatprep.subr.mxu0 0.0
      %259 = vmatpush1.xpose.msra.mxu0 0.0
      %260 = vmatprep.subr.mxu0 0.0
      %261 = vmatpush1.xpose.msra.mxu0 0.0
      %262 = vmatprep.subr.mxu0 0.0
      %263 = vmatpush1.xpose.msra.mxu0 0.0
      %264 = vmatprep.subr.mxu0 0.0
      %265 = vmatpush1.xpose.msra.mxu0 0.0
      %266 = vmatprep.subr.mxu0 0.0
      %267 = vmatpush1.xpose.msra.mxu0 0.0
      %268 = vmatprep.subr.mxu0 0.0
      %269 = vmatpush1.xpose.msra.mxu0 0.0
      %270 = vmatprep.subr.mxu0 0.0
      %271 = vmatpush1.xpose.msra.mxu0 0.0
      %272 = vmatprep.subr.mxu0 0.0
      %273 = vmatpush1.xpose.msra.mxu0 0.0
      %274 = vmatprep.subr.mxu0 0.0
      %275 = vmatpush1.xpose.msra.mxu0 0.0
      %276 = vmatprep.subr.mxu0 0.0
      %277 = vmatpush1.xpose.msra.mxu0 0.0
      %278 = vmatprep.subr.mxu0 0.0
      %279 = vmatpush1.xpose.msra.mxu0 0.0
      %280 = vmatprep.subr.mxu0 0.0
      %281 = vmatpush1.xpose.msra.mxu0 0.0
      %282 = vmatprep.subr.mxu0 0.0
      %283 = vmatpush1.xpose.msra.mxu0 0.0
      %284 = vmatprep.subr.mxu0 0.0
      %285 = vmatpush1.xpose.msra.mxu0 0.0
      %286 = vmatprep.subr.mxu0 0.0
      %287 = vmatpush1.xpose.msra.mxu0 0.0
      %288 = vmatprep.subr.mxu0 0.0
      %289 = vmatpush1.xpose.msra.mxu0 0.0
      %290 = vmatprep.subr.mxu0 0.0
      %291 = vmatpush1.xpose.msra.mxu0 0.0
      %292 = vmatprep.subr.mxu0 0.0
      %293 = vmatpush1.xpose.msra.mxu0 0.0
      %294 = vmatprep.subr.mxu0 0.0
      %295 = vmatpush1.xpose.msra.mxu0 0.0
      %296 = vmatprep.subr.mxu0 0.0
      %297 = vmatpush1.xpose.msra.mxu0 0.0
      %298 = vmatprep.subr.mxu0 0.0
      %299 = vmatpush1.xpose.msra.mxu0 0.0
      %300 = vmatprep.subr.mxu0 0.0
      %301 = vmatpush1.xpose.msra.mxu0 0.0
      %302 = vmatprep.subr.mxu0 0.0
      %303 = vmatpush1.xpose.msra.mxu0 0.0
      %304 = vmatprep.subr.mxu0 0.0
      %305 = vmatpush1.xpose.msra.mxu0 0.0
      %306 = vmatprep.subr.mxu0 0.0
      %307 = vmatpush1.xpose.msra.mxu0 0.0
      %308 = vmatprep.subr.mxu0 0.0
      %309 = vmatpush1.xpose.msra.mxu0 0.0
      %310 = vmatprep.subr.mxu0 0.0
      %311 = vmatpush1.xpose.msra.mxu0 0.0
      %312 = vmatprep.subr.mxu0 0.0
      %313 = vmatpush1.xpose.msra.mxu0 0.0
      %314 = vmatprep.subr.mxu0 0.0
      %315 = vmatpush1.xpose.msra.mxu0 0.0
      %316 = vmatprep.subr.mxu0 0.0
      %317 = vmatpush1.xpose.msra.mxu0 0.0
      %318 = vmatprep.mubr.f32.mxu0 0.0
      %319 = vmatmul.mubr.f32.gmra.mrb[0].mxu0 %v201
      %v320 = vpop.f32.mrb[0].mxu0
      %v321 = vadd.f32 %v197, %v320
      %v322 = vpop.f32.mrb[0].mxu0
      %323 = vmatprep.mubr.f32.mxu0 0.0
      %324 = vmatmul.mubr.f32.gmra.mrb[0].mxu0 %v204
      %v325 = vpop.f32.mrb[0].mxu0
      %v326 = vadd.f32 %v197, %v325
      %v327 = vpop.f32.mrb[0].mxu0
      %328 = vmatprep.mubr.f32.mxu0 0.0
      %329 = vmatmul.mubr.f32.gmra.mrb[0].mxu0 %v207
      %v330 = vpop.f32.mrb[0].mxu0
      %v331 = vadd.f32 %v197, %v330
      %v332 = vpop.f32.mrb[0].mxu0
      %333 = vmatprep.mubr.f32.mxu0 0.0
      %334 = vmatmul.mubr.f32.gmra.mrb[0].mxu0 %v210
      %v335 = vpop.f32.mrb[0].mxu0
      %v336 = vadd.f32 %v197, %v335
      %v337 = vpop.f32.mrb[0].mxu0
      %338 = vmatprep.mubr.f32.mxu0 0.0
      %339 = vmatmul.mubr.f32.gmra.mrb[0].mxu0 %v213
      %v340 = vpop.f32.mrb[0].mxu0
      %v341 = vadd.f32 %v197, %v340
      %v342 = vpop.f32.mrb[0].mxu0
      %343 = vmatprep.mubr.f32.mxu0 0.0
      %344 = vmatmul.mubr.f32.gmra.mrb[0].mxu0 %v216
      %v345 = vpop.f32.mrb[0].mxu0
      %v346 = vadd.f32 %v197, %v345
      %v347 = vpop.f32.mrb[0].mxu0
      %348 = vmatprep.mubr.f32.mxu0 0.0
      %349 = vmatmul.mubr.f32.gmra.mrb[0].mxu0 %v219
      %v350 = vpop.f32.mrb[0].mxu0
      %v351 = vadd.f32 %v197, %v350
      %v352 = vpop.f32.mrb[0].mxu0
      %353 = vmatprep.mubr.f32.mxu0 0.0
      %354 = vmatmul.mubr.f32.gmra.mrb[0].mxu0 %v222
      %v355 = vpop.f32.mrb[0].mxu0
      %v356 = vadd.f32 %v197, %v355
      %v357 = vpop.f32.mrb[0].mxu0
      %358 = vmatprep.mubr.f32.mxu0 0.0
      %359 = vmatmul.mubr.f32.gmra.mrb[0].mxu0 %v225
      %v360 = vpop.f32.mrb[0].mxu0
      %v361 = vadd.f32 %v197, %v360
      %v362 = vpop.f32.mrb[0].mxu0
      %363 = vmatprep.mubr.f32.mxu0 0.0
      %364 = vmatmul.mubr.f32.gmra.mrb[0].mxu0 %v228
      %v365 = vpop.f32.mrb[0].mxu0
      %v366 = vadd.f32 %v197, %v365
      %v367 = vpop.f32.mrb[0].mxu0
      %368 = vmatprep.mubr.f32.mxu0 0.0
      %369 = vmatmul.mubr.f32.gmra.mrb[0].mxu0 %v231
      %v370 = vpop.f32.mrb[0].mxu0
      %v371 = vadd.f32 %v197, %v370
      %v372 = vpop.f32.mrb[0].mxu0
      %373 = vmatprep.mubr.f32.mxu0 0.0
      %374 = vmatmul.mubr.f32.gmra.mrb[0].mxu0 %v234
      %v375 = vpop.f32.mrb[0].mxu0
      %v376 = vadd.f32 %v197, %v375
      %v377 = vpop.f32.mrb[0].mxu0
      %378 = vmatprep.mubr.f32.mxu0 0.0
      %379 = vmatmul.mubr.f32.gmra.mrb[0].mxu0 %v237
      %v380 = vpop.f32.mrb[0].mxu0
      %v381 = vadd.f32 %v197, %v380
      %v382 = vpop.f32.mrb[0].mxu0
      %383 = vmatprep.mubr.f32.mxu0 0.0
      %384 = vmatmul.mubr.f32.gmra.mrb[0].mxu0 %v240
      %v385 = vpop.f32.mrb[0].mxu0
      %v386 = vadd.f32 %v197, %v385
      %v387 = vpop.f32.mrb[0].mxu0
      %388 = vmatprep.mubr.f32.mxu0 0.0
      %389 = vmatmul.mubr.f32.gmra.mrb[0].mxu0 %v243
      %v390 = vpop.f32.mrb[0].mxu0
      %v391 = vadd.f32 %v197, %v390
      %v392 = vpop.f32.mrb[0].mxu0
      %393 = vmatprep.mubr.f32.mxu0 0.0
      %394 = vmatmul.mubr.f32.gmra.mrb[0].mxu0 %v246
      %v395 = vpop.f32.mrb[0].mxu0
      %v396 = vadd.f32 %v197, %v395
      %v397 = vpop.f32.mrb[0].mxu0
      %398 = vdwg.mxu0
      %vm399 = vcmask 130048
      %v400 = vsel %vm399, %v321, -inf
      %401 = vmax.xlane.f32.xlu0 %v400
      %v402 = vpop.xlane.xlu0 %401
      %v403 = vsel %vm399, %v326, -inf
      %404 = vmax.xlane.f32.xlu0 %v403
      %v405 = vpop.xlane.xlu0 %404
      %v406 = vsel %vm399, %v331, -inf
      %407 = vmax.xlane.f32.xlu0 %v406
      %v408 = vpop.xlane.xlu0 %407
      %v409 = vsel %vm399, %v336, -inf
      %410 = vmax.xlane.f32.xlu0 %v409
      %v411 = vpop.xlane.xlu0 %410
      %v412 = vsel %vm399, %v341, -inf
      %413 = vmax.xlane.f32.xlu0 %v412
      %v414 = vpop.xlane.xlu0 %413
      %v415 = vsel %vm399, %v346, -inf
      %416 = vmax.xlane.f32.xlu0 %v415
      %v417 = vpop.xlane.xlu0 %416
      %v418 = vsel %vm399, %v351, -inf
      %419 = vmax.xlane.f32.xlu0 %v418
      %v420 = vpop.xlane.xlu0 %419
      %v421 = vsel %vm399, %v356, -inf
      %422 = vmax.xlane.f32.xlu0 %v421
      %v423 = vpop.xlane.xlu0 %422
      %v424 = vsel %vm399, %v361, -inf
      %425 = vmax.xlane.f32.xlu0 %v424
      %v426 = vpop.xlane.xlu0 %425
      %v427 = vsel %vm399, %v366, -inf
      %428 = vmax.xlane.f32.xlu0 %v427
      %v429 = vpop.xlane.xlu0 %428
      %v430 = vsel %vm399, %v371, -inf
      %431 = vmax.xlane.f32.xlu0 %v430
      %v432 = vpop.xlane.xlu0 %431
      %v433 = vsel %vm399, %v376, -inf
      %434 = vmax.xlane.f32.xlu0 %v433
      %v435 = vpop.xlane.xlu0 %434
      %v436 = vsel %vm399, %v381, -inf
      %437 = vmax.xlane.f32.xlu0 %v436
      %v438 = vpop.xlane.xlu0 %437
      %v439 = vsel %vm399, %v386, -inf
      %440 = vmax.xlane.f32.xlu0 %v439
      %v441 = vpop.xlane.xlu0 %440
      %v442 = vsel %vm399, %v391, -inf
      %443 = vmax.xlane.f32.xlu0 %v442
      %v444 = vpop.xlane.xlu0 %443
      %v445 = vsel %vm399, %v396, -inf
      %446 = vmax.xlane.f32.xlu0 %v445
      %v447 = vpop.xlane.xlu0 %446
      %v448 = vsub.f32 %v321, %v402
      %v449 = vsub.f32 %v326, %v405
      %v450 = vsub.f32 %v331, %v408
      %v451 = vsub.f32 %v336, %v411
      %v452 = vsub.f32 %v341, %v414
      %v453 = vsub.f32 %v346, %v417
      %v454 = vsub.f32 %v351, %v420
      %v455 = vsub.f32 %v356, %v423
      %v456 = vsub.f32 %v361, %v426
      %v457 = vsub.f32 %v366, %v429
      %v458 = vsub.f32 %v371, %v432
      %v459 = vsub.f32 %v376, %v435
      %v460 = vsub.f32 %v381, %v438
      %v461 = vsub.f32 %v386, %v441
      %v462 = vsub.f32 %v391, %v444
      %v463 = vsub.f32 %v396, %v447
      %v464 = vmul.f32 %v448, 1.442695
      %v465 = vpow.pop %v464
      %v466 = vmul.f32 %v449, 1.442695
      %v467 = vpow.pop %v466
      %v468 = vmul.f32 %v450, 1.442695
      %v469 = vpow.pop %v468
      %v470 = vmul.f32 %v451, 1.442695
      %v471 = vpow.pop %v470
      %v472 = vmul.f32 %v452, 1.442695
      %v473 = vpow.pop %v472
      %v474 = vmul.f32 %v453, 1.442695
      %v475 = vpow.pop %v474
      %v476 = vmul.f32 %v454, 1.442695
      %v477 = vpow.pop %v476
      %v478 = vmul.f32 %v455, 1.442695
      %v479 = vpow.pop %v478
      %v480 = vmul.f32 %v456, 1.442695
      %v481 = vpow.pop %v480
      %v482 = vmul.f32 %v457, 1.442695
      %v483 = vpow.pop %v482
      %v484 = vmul.f32 %v458, 1.442695
      %v485 = vpow.pop %v484
      %v486 = vmul.f32 %v459, 1.442695
      %v487 = vpow.pop %v486
      %v488 = vmul.f32 %v460, 1.442695
      %v489 = vpow.pop %v488
      %v490 = vmul.f32 %v461, 1.442695
      %v491 = vpow.pop %v490
      %v492 = vmul.f32 %v462, 1.442695
      %v493 = vpow.pop %v492
      %v494 = vmul.f32 %v463, 1.442695
      %v495 = vpow.pop %v494
      %v496 = vsel %vm399, %v465, 0.0
      %497 = vadd.xlane.f32.xlu0 %v496
      %v498 = vpop.xlane.xlu0 %497
      %v499 = vsel %vm399, %v467, 0.0
      %500 = vadd.xlane.f32.xlu0 %v499
      %v501 = vpop.xlane.xlu0 %500
      %v502 = vsel %vm399, %v469, 0.0
      %503 = vadd.xlane.f32.xlu0 %v502
      %v504 = vpop.xlane.xlu0 %503
      %v505 = vsel %vm399, %v471, 0.0
      %506 = vadd.xlane.f32.xlu0 %v505
      %v507 = vpop.xlane.xlu0 %506
      %v508 = vsel %vm399, %v473, 0.0
      %509 = vadd.xlane.f32.xlu0 %v508
      %v510 = vpop.xlane.xlu0 %509
      %v511 = vsel %vm399, %v475, 0.0
      %512 = vadd.xlane.f32.xlu0 %v511
      %v513 = vpop.xlane.xlu0 %512
      %v514 = vsel %vm399, %v477, 0.0
      %515 = vadd.xlane.f32.xlu0 %v514
      %v516 = vpop.xlane.xlu0 %515
      %v517 = vsel %vm399, %v479, 0.0
      %518 = vadd.xlane.f32.xlu0 %v517
      %v519 = vpop.xlane.xlu0 %518
      %v520 = vsel %vm399, %v481, 0.0
      %521 = vadd.xlane.f32.xlu0 %v520
      %v522 = vpop.xlane.xlu0 %521
      %v523 = vsel %vm399, %v483, 0.0
      %524 = vadd.xlane.f32.xlu0 %v523
      %v525 = vpop.xlane.xlu0 %524
      %v526 = vsel %vm399, %v485, 0.0
      %527 = vadd.xlane.f32.xlu0 %v526
      %v528 = vpop.xlane.xlu0 %527
      %v529 = vsel %vm399, %v487, 0.0
      %530 = vadd.xlane.f32.xlu0 %v529
      %v531 = vpop.xlane.xlu0 %530
      %v532 = vsel %vm399, %v489, 0.0
      %533 = vadd.xlane.f32.xlu0 %v532
      %v534 = vpop.xlane.xlu0 %533
      %v535 = vsel %vm399, %v491, 0.0
      %536 = vadd.xlane.f32.xlu0 %v535
      %v537 = vpop.xlane.xlu0 %536
      %v538 = vsel %vm399, %v493, 0.0
      %539 = vadd.xlane.f32.xlu0 %v538
      %v540 = vpop.xlane.xlu0 %539
      %v541 = vsel %vm399, %v495, 0.0
      %542 = vadd.xlane.f32.xlu0 %v541
      %v543 = vpop.xlane.xlu0 %542
      %v544 = vrcp.pop %v498
      %v545 = vrcp.pop %v501
      %v546 = vrcp.pop %v504
      %v547 = vrcp.pop %v507
      %v548 = vrcp.pop %v510
      %v549 = vrcp.pop %v513
      %v550 = vrcp.pop %v516
      %v551 = vrcp.pop %v519
      %v552 = vrcp.pop %v522
      %v553 = vrcp.pop %v525
      %v554 = vrcp.pop %v528
      %v555 = vrcp.pop %v531
      %v556 = vrcp.pop %v534
      %v557 = vrcp.pop %v537
      %v558 = vrcp.pop %v540
      %v559 = vrcp.pop %v543
      %v560 = vmul.f32 %v498, %v544
      %v561 = vmul.f32 %v501, %v545
      %v562 = vmul.f32 %v504, %v546
      %v563 = vmul.f32 %v507, %v547
      %v564 = vmul.f32 %v510, %v548
      %v565 = vmul.f32 %v513, %v549
      %v566 = vmul.f32 %v516, %v550
      %v567 = vmul.f32 %v519, %v551
      %v568 = vmul.f32 %v522, %v552
      %v569 = vmul.f32 %v525, %v553
      %v570 = vmul.f32 %v528, %v554
      %v571 = vmul.f32 %v531, %v555
      %v572 = vmul.f32 %v534, %v556
      %v573 = vmul.f32 %v537, %v557
      %v574 = vmul.f32 %v540, %v558
      %v575 = vmul.f32 %v543, %v559
      %v576 = vsub.f32 2.0, %v560
      %v577 = vsub.f32 2.0, %v561
      %v578 = vsub.f32 2.0, %v562
      %v579 = vsub.f32 2.0, %v563
      %v580 = vsub.f32 2.0, %v564
      %v581 = vsub.f32 2.0, %v565
      %v582 = vsub.f32 2.0, %v566
      %v583 = vsub.f32 2.0, %v567
      %v584 = vsub.f32 2.0, %v568
      %v585 = vsub.f32 2.0, %v569
      %v586 = vsub.f32 2.0, %v570
      %v587 = vsub.f32 2.0, %v571
      %v588 = vsub.f32 2.0, %v572
      %v589 = vsub.f32 2.0, %v573
      %v590 = vsub.f32 2.0, %v574
      %v591 = vsub.f32 2.0, %v575
      %v592 = vmul.f32 %v544, %v576
      %v593 = vmul.f32 %v545, %v577
      %v594 = vmul.f32 %v546, %v578
      %v595 = vmul.f32 %v547, %v579
      %v596 = vmul.f32 %v548, %v580
      %v597 = vmul.f32 %v549, %v581
      %v598 = vmul.f32 %v550, %v582
      %v599 = vmul.f32 %v551, %v583
      %v600 = vmul.f32 %v552, %v584
      %v601 = vmul.f32 %v553, %v585
      %v602 = vmul.f32 %v554, %v586
      %v603 = vmul.f32 %v555, %v587
      %v604 = vmul.f32 %v556, %v588
      %v605 = vmul.f32 %v557, %v589
      %v606 = vmul.f32 %v558, %v590
      %v607 = vmul.f32 %v559, %v591
      %v608 = vmul.f32 %v465, %v592
      %v609 = vmul.f32 %v467, %v593
      %v610 = vmul.f32 %v469, %v594
      %v611 = vmul.f32 %v471, %v595
      %v612 = vmul.f32 %v473, %v596
      %v613 = vmul.f32 %v475, %v597
      %v614 = vmul.f32 %v477, %v598
      %v615 = vmul.f32 %v479, %v599
      %v616 = vmul.f32 %v481, %v600
      %v617 = vmul.f32 %v483, %v601
      %v618 = vmul.f32 %v485, %v602
      %v619 = vmul.f32 %v487, %v603
      %v620 = vmul.f32 %v489, %v604
      %v621 = vmul.f32 %v491, %v605
      %v622 = vmul.f32 %v493, %v606
      %v623 = vmul.f32 %v495, %v607
      %624 = vst.msk [vmem:[%s172] sm:$0xff] %vm399, %v608
      %625 = vst.msk [vmem:[%s172 + $0x8] sm:$0xff] %vm399, %v609
      %626 = vst.msk [vmem:[%s172 + $0x10] sm:$0xff] %vm399, %v610
      %627 = vst.msk [vmem:[%s172 + $0x18] sm:$0xff] %vm399, %v611
      %628 = vst.msk [vmem:[%s172 + $0x20] sm:$0xff] %vm399, %v612
      %629 = vst.msk [vmem:[%s172 + $0x28] sm:$0xff] %vm399, %v613
      %630 = vst.msk [vmem:[%s172 + $0x30] sm:$0xff] %vm399, %v614
      %631 = vst.msk [vmem:[%s172 + $0x38] sm:$0xff] %vm399, %v615
      %632 = vst.msk [vmem:[%s172 + $0x40] sm:$0xff] %vm399, %v616
      %633 = vst.msk [vmem:[%s172 + $0x48] sm:$0xff] %vm399, %v617
      %634 = vst.msk [vmem:[%s172 + $0x50] sm:$0xff] %vm399, %v618
      %635 = vst.msk [vmem:[%s172 + $0x58] sm:$0xff] %vm399, %v619
      %636 = vst.msk [vmem:[%s172 + $0x60] sm:$0xff] %vm399, %v620
      %637 = vst.msk [vmem:[%s172 + $0x68] sm:$0xff] %vm399, %v621
      %638 = vst.msk [vmem:[%s172 + $0x70] sm:$0xff] %vm399, %v622
      %639 = vst.msk [vmem:[%s172 + $0x78] sm:$0xff] %vm399, %v623
      %s640 = smul.u32 16, %s14
      %p641 = scmp.lt.s32.totalorder %s640, 31
      %s642 = scalar_select %p641, %s640, 31
      %s643 = smul.addr %s642, 8
      %s644 = scalar_lea.vmem %s3, %s643
      // Predicated region
      $region33: #{tpu_custom_call.1} parent=31 // pred_check
        %p645 = pneg %p100
      $region34: #{tpu_custom_call.1} parent=31 // pred_check_branch
        %647 = sbr.rel (%p645) target = $region36
      $region35: #{tpu_custom_call.1} parent=31 // pred_region
        %s648 = smul.u32 16, %s14
      $region36: #{tpu_custom_call.1} parent=31 // pred_fallthru
        _
    $region32: #{tpu_custom_call.1} parent=5 // pred_fallthru
      _
    %p649 = scmp.le.s32.totalorder 2, %s9
    // Predicated region
    $region37: #{tpu_custom_call.1} parent=5 // pred_check
      %p650 = pneg %p649
    $region38: #{tpu_custom_call.1} parent=5 // pred_check_branch
      %652 = sbr.rel (%p650) target = $region40
    $region39: #{tpu_custom_call.1} parent=5 // pred_region
      %s653 = ssub.s32 %s9, 2
      // Predicated region
      $region41: #{tpu_custom_call.1} parent=39 // pred_check
        %p654 = pneg %p106
      $region42: #{tpu_custom_call.1} parent=39 // pred_check_branch
        %656 = sbr.rel (%p654) target = $region44
      $region43: #{tpu_custom_call.1} parent=39 // pred_region
        %s657 = smul.u32 16, %s15
        %p658 = scmp.lt.s32.totalorder %s657, 31
        %s659 = scalar_select %p658, %s657, 31
        %s660 = smul.addr %s659, 8
        %s661 = scalar_lea.vmem %s3, %s660
      $region44: #{tpu_custom_call.1} parent=39 // pred_fallthru
        _
    $region40: #{tpu_custom_call.1} parent=5 // pred_fallthru
      _
  $region6: #{tpu_custom_call.1} parent=0 // loop_footer
    %s13 = sadd.s32 1, %s9
  $region7: #{tpu_custom_call.1} parent=0 // loop_footer_branch
    %8 = sbr.rel target = $region3
  $region8: #{tpu_custom_call.1} parent=0 // loop_exit
    _

</llo_original>
